<compile_context>
chip_gen: v7x
topology: tpu7x:2x2x1
jax: 0.10.0
libtpu: 0.0.40
codegen_flags: <defaults>
</compile_context>

<pallas_src>
import numpy as np
import jax
import jax.numpy as jnp
from jax import lax
from jax.experimental import pallas as pl
from jax.experimental.pallas import tpu as pltpu

# ---- static problem geometry ---------------------------------------------------
C_IN, C_MID, C_OUT = 3, 8, 8
KK = 4                         # kernel size of both convs
HI, WI = 16, 16                # x1 spatial
HM, WM = 8, 8                  # v1 spatial (after the stride-2 down conv)
HO, WO = 16, 16                # output spatial
MO = HO * WO                   # 256 output pixels (lane-dense)
NTAP = KK * KK                 # 16 deconv taps
WIN = 2 * (KK - 1) + 1         # 7: composed conv->deconv receptive field (7x7)
KROW = 24                      # rows per dy-block of the patch matrix (3*7=21 -> 24)
KDIM = WIN * KROW              # 168: contraction dim of the single fused GEMM
HP = HI + 2 * (KK - 1)         # 22: height of x1 padded by 3


# ---- the single fused Pallas kernel --------------------------------------------
def _fused_kernel(xw_ref, x2_ref, wbig_ref, mask_ref, bias_ref, o_ref):
    # xw_ref  : (1, 24, 352)  width-unfolded pad-3 x1, rows (ci,dx), cols h*16+ow
    # x2_ref  : (1, 8, 256)   residual input, NCHW-flat
    # wbig_ref: (128, 168)    folded conv∘deconv weights, rows (tap, co)
    # mask_ref: (16, 256)     per-tap phase/validity 0/1 masks over output pixels
    # bias_ref: (8, 256)      precomputed bias map (b1 pushed through deconv + b2)
    # o_ref   : (1, 8, 256)
    xw = xw_ref[0]                                                      # (24, 352)

    # composite 7x7 im2col: the 7 dy-blocks are lane-shifted views of the width
    # unfold (static slices, 8-aligned sublane concat) -> (168, 256) in VMEM only.
    xpatch = jnp.concatenate(
        [xw[:, WO * dy: WO * dy + MO] for dy in range(WIN)], axis=0)    # (168, 256)

    # ONE MXU GEMM: all 16 deconv taps x 8 output channels at every output pixel.
    taps = jnp.dot(wbig_ref[...], xpatch,
                   preferred_element_type=jnp.float32)                  # (128, 256)

    # col2im overlap-add == per-tap 0/1 lane masks; bias + residual + sigmoid (VPU/EUP).
    acc = bias_ref[...] - x2_ref[0]
    for t in range(NTAP):
        acc = acc + taps[t * C_OUT:(t + 1) * C_OUT, :] * mask_ref[t:t + 1, :]
    o_ref[0] = jax.nn.sigmoid(acc)


def fused_forward_pallas(xw, x2f, wbig, mask, bias_map):
    N = xw.shape[0]
    return pl.pallas_call(
        _fused_kernel,
        out_shape=jax.ShapeDtypeStruct((N, C_OUT, MO), jnp.float32),
        grid=(N,),
        in_specs=[
            pl.BlockSpec((1, KROW, HP * WO), lambda n: (n, 0, 0)),      # width unfold
            pl.BlockSpec((1, C_OUT, MO), lambda n: (n, 0, 0)),          # x2 (NCHW flat)
            pl.BlockSpec((NTAP * C_OUT, KDIM), lambda n: (0, 0)),       # Wbig (128,168)
            pl.BlockSpec((NTAP, MO), lambda n: (0, 0)),                 # tap masks
            pl.BlockSpec((C_OUT, MO), lambda n: (0, 0)),                # bias map
        ],
        out_specs=pl.BlockSpec((1, C_OUT, MO), lambda n: (n, 0, 0)),
        compiler_params=pltpu.CompilerParams(
            dimension_semantics=("parallel",)),
    )(xw, x2f, wbig, mask, bias_map)


# ---- offline parameter folding (done ONCE, never per forward) -------------------
def _lax_conv_deconv(x, w_down, b_down, w_up, b_up):
    """Pure-lax Conv2d(3,8,4,s2,p1) -> ConvTranspose2d(8,8,4,s2,p1), with biases."""
    dn = ('NCHW', 'OIHW', 'NCHW')
    v1 = lax.conv_general_dilated(x, w_down, (2, 2), [(1, 1), (1, 1)],
                                  dimension_numbers=dn)
    v1 = v1 + b_down[None, :, None, None]
    w_conv = jnp.transpose(w_up, (1, 0, 2, 3))[:, :, ::-1, ::-1]
    v2 = lax.conv_general_dilated(v1, w_conv, (1, 1), [(2, 2), (2, 2)],
                                  lhs_dilation=(2, 2), dimension_numbers=dn)
    return v2 + b_up[None, :, None, None]


def prepare_params(w_down, b_down, w_up, b_up):
    """Fold Conv2d -> ConvTranspose2d -> col2im into (Wbig, tap masks, bias map)."""
    w_down_n = np.asarray(w_down, np.float32)       # (cm, ci, kh, kw)
    w_up_n = np.asarray(w_up, np.float32)           # (cm, co, kh2, kw2)

    # composed per-tap weights: Wfold[kh2,kw2,co,ci,kh,kw] = sum_cm W2 * W1
    wfold = np.einsum('mokl,mcij->klocij', w_up_n, w_down_n)   # (4,4,8,3,4,4)

    # Wbig[(tap, co), (dy, ci, dx)]: place each tap's 3x4x4 block at its offset
    # inside the composed 7x7 window (dy = 3 - kh2 + kh, dx = 3 - kw2 + kw).
    wbig = np.zeros((NTAP * C_OUT, KDIM), np.float32)
    for kh2 in range(KK):
        for kw2 in range(KK):
            t = kh2 * KK + kw2
            for kh in range(KK):
                dy = 3 - kh2 + kh
                for kw in range(KK):
                    dx = 3 - kw2 + kw
                    for ci in range(C_IN):
                        col = dy * KROW + ci * WIN + dx
                        wbig[t * C_OUT:(t + 1) * C_OUT, col] = wfold[kh2, kw2, :, ci, kh, kw]

    # per-tap validity/phase masks over output pixels:
    # tap (kh2,kw2) contributes to (oh,ow) iff ih=(oh+1-kh2)/2 and iw=(ow+1-kw2)/2
    # are integers in [0,8)  (exact ConvTranspose2d border semantics).
    mask = np.zeros((NTAP, MO), np.float32)
    for kh2 in range(KK):
        ok_h = [oh for oh in range(HO)
                if (oh + 1 - kh2) % 2 == 0 and 0 <= (oh + 1 - kh2) // 2 < HM]
        for kw2 in range(KK):
            ok_w = [ow for ow in range(WO)
                    if (ow + 1 - kw2) % 2 == 0 and 0 <= (ow + 1 - kw2) // 2 < WM]
            t = kh2 * KK + kw2
            for oh in ok_h:
                for ow in ok_w:
                    mask[t, oh * WO + ow] = 1.0

    # full bias map = composed pipeline applied to a zero input (exact, incl. borders)
    bias_map = _lax_conv_deconv(jnp.zeros((1, C_IN, HI, WI), jnp.float32),
                                w_down, b_down, w_up, b_up).reshape(C_OUT, MO)

    return (jnp.asarray(wbig), jnp.asarray(mask), jnp.asarray(bias_map, jnp.float32))


# ---- JAX-side glue --------------------------------------------------------------
@jax.jit
def model_forward(x1, x2, params):
    wbig, mask, bias_map = params
    N = x1.shape[0]
    # tiny width-only unfold of pad-3 x1: (N, 24, 352); the full 7x7 im2col is
    # assembled inside the kernel (no inflated patch matrix round-trips HBM).
    xp3 = jnp.pad(x1, ((0, 0), (0, 0), (3, 3), (3, 3)))                 # (N,3,22,22)
    cols = [xp3[:, :, :, dx:dx + WO] for dx in range(WIN)]              # (N,3,22,16)
    xw = jnp.stack(cols, axis=2).reshape(N, C_IN * WIN, HP * WO)        # (N,21,352)
    xw = jnp.pad(xw, ((0, 0), (0, KROW - C_IN * WIN), (0, 0)))          # (N,24,352)

    x2f = x2.reshape(N, C_OUT, MO)                                      # free reshape
    out = fused_forward_pallas(xw, x2f, wbig, mask, bias_map)
    return out.reshape(N, C_OUT, HO, WO)                                # free reshape


# ---- pure-lax reference for the correctness check -------------------------------
def reference_forward(x1, x2, w_down, b_down, w_up, b_up):
    return jax.nn.sigmoid(_lax_conv_deconv(x1, w_down, b_down, w_up, b_up) - x2)


if __name__ == "__main__":
    key = jax.random.PRNGKey(0)
    k1, k2, k3, k4, k5, k6 = jax.random.split(key, 6)

    # deterministic parameter init (PyTorch-style uniform bounds)
    bd = 1.0 / np.sqrt(C_IN * KK * KK)
    w_down = jax.random.uniform(k1, (C_MID, C_IN, KK, KK), jnp.float32, -bd, bd)
    b_down = jax.random.uniform(k2, (C_MID,), jnp.float32, -bd, bd)
    bu = 1.0 / np.sqrt(C_MID * KK * KK)
    w_up = jax.random.uniform(k3, (C_MID, C_OUT, KK, KK), jnp.float32, -bu, bu)
    b_up = jax.random.uniform(k4, (C_OUT,), jnp.float32, -bu, bu)

    # inputs (NCHW); x2 chosen broadcast-compatible with up(down(x1))
    x1 = jax.random.normal(k5, (2, C_IN, HI, WI), jnp.float32)
    x2 = jax.random.normal(k6, (2, C_OUT, HO, WO), jnp.float32)

    params = prepare_params(w_down, b_down, w_up, b_up)   # hoisted, done once

    out = jax.block_until_ready(model_forward(x1, x2, params))
    ref = jax.block_until_ready(reference_forward(x1, x2, w_down, b_down, w_up, b_up))

    np.testing.assert_allclose(np.asarray(out), np.asarray(ref), rtol=2e-4, atol=2e-5)
    print("KERNEL_OK")
</pallas_src>

<mosaic_0001>
module attributes {stable_mosaic.version = 11 : i64} {
  func.func @_fused_kernel(%arg0: i32, %arg1: memref<1x24x352xf32, #tpu.memory_space<vmem>>, %arg2: memref<1x8x256xf32, #tpu.memory_space<vmem>>, %arg3: memref<128x168xf32, #tpu.memory_space<vmem>>, %arg4: memref<16x256xf32, #tpu.memory_space<vmem>>, %arg5: memref<8x256xf32, #tpu.memory_space<vmem>>, %arg6: memref<1x8x256xf32, #tpu.memory_space<vmem>>) attributes {dimension_semantics = [#tpu.dimension_semantics<parallel>], iteration_bounds = array<i64: 2>, scalar_prefetch = 0 : i64, scratch_operands = 0 : i64, tpu.core_type = #tpu.core_type<tc>, window_params = [{transform_indices = @transform_0, window_bounds = array<i64: 1, 24, 352>}, {transform_indices = @transform_1, window_bounds = array<i64: 1, 8, 256>}, {pipeline_mode = #tpu.pipeline_mode<synchronous>, transform_indices = @transform_2, window_bounds = array<i64: 128, 168>}, {pipeline_mode = #tpu.pipeline_mode<synchronous>, transform_indices = @transform_3, window_bounds = array<i64: 16, 256>}, {pipeline_mode = #tpu.pipeline_mode<synchronous>, transform_indices = @transform_4, window_bounds = array<i64: 8, 256>}, {transform_indices = @transform_5, window_bounds = array<i64: 1, 8, 256>}]} {
    %c0 = arith.constant 0 : index
    %c0_0 = arith.constant 0 : index
    %c0_1 = arith.constant 0 : index
    %0 = vector.load %arg1[%c0, %c0_0, %c0_1] : memref<1x24x352xf32, #tpu.memory_space<vmem>>, vector<1x24x352xf32>
    %1 = vector.shape_cast %0 : vector<1x24x352xf32> to vector<24x352xf32>
    %2 = vector.extract_strided_slice %1 {offsets = [0, 0], sizes = [24, 256], strides = [1, 1]} : vector<24x352xf32> to vector<24x256xf32>
    %3 = vector.extract_strided_slice %1 {offsets = [0, 16], sizes = [24, 256], strides = [1, 1]} : vector<24x352xf32> to vector<24x256xf32>
    %4 = vector.extract_strided_slice %1 {offsets = [0, 32], sizes = [24, 256], strides = [1, 1]} : vector<24x352xf32> to vector<24x256xf32>
    %5 = vector.extract_strided_slice %1 {offsets = [0, 48], sizes = [24, 256], strides = [1, 1]} : vector<24x352xf32> to vector<24x256xf32>
    %6 = vector.extract_strided_slice %1 {offsets = [0, 64], sizes = [24, 256], strides = [1, 1]} : vector<24x352xf32> to vector<24x256xf32>
    %7 = vector.extract_strided_slice %1 {offsets = [0, 80], sizes = [24, 256], strides = [1, 1]} : vector<24x352xf32> to vector<24x256xf32>
    %8 = vector.extract_strided_slice %1 {offsets = [0, 96], sizes = [24, 256], strides = [1, 1]} : vector<24x352xf32> to vector<24x256xf32>
    %9 = tpu.concatenate %2, %3, %4, %5, %6, %7, %8 in 0 : vector<24x256xf32>, vector<24x256xf32>, vector<24x256xf32>, vector<24x256xf32>, vector<24x256xf32>, vector<24x256xf32>, vector<24x256xf32> -> vector<168x256xf32>
    %c0_2 = arith.constant 0 : index
    %c0_3 = arith.constant 0 : index
    %10 = vector.load %arg3[%c0_2, %c0_3] : memref<128x168xf32, #tpu.memory_space<vmem>>, vector<128x168xf32>
    %cst = arith.constant dense<0.000000e+00> : vector<128x256xf32>
    %11 = tpu.matmul %10, %9, %cst {dimension_numbers = #tpu.dot_dimension_numbers<[1], [0], [0], [1], [0, 0, 1, 1], [], []>} : vector<128x168xf32>, vector<168x256xf32>, vector<128x256xf32> -> vector<128x256xf32>
    %c0_4 = arith.constant 0 : index
    %c0_5 = arith.constant 0 : index
    %12 = vector.load %arg5[%c0_4, %c0_5] : memref<8x256xf32, #tpu.memory_space<vmem>>, vector<8x256xf32>
    %c0_6 = arith.constant 0 : index
    %c0_7 = arith.constant 0 : index
    %c0_8 = arith.constant 0 : index
    %13 = vector.load %arg2[%c0_6, %c0_7, %c0_8] : memref<1x8x256xf32, #tpu.memory_space<vmem>>, vector<1x8x256xf32>
    %14 = vector.shape_cast %13 : vector<1x8x256xf32> to vector<8x256xf32>
    %15 = arith.subf %12, %14 : vector<8x256xf32>
    %16 = vector.extract_strided_slice %11 {offsets = [0, 0], sizes = [8, 256], strides = [1, 1]} : vector<128x256xf32> to vector<8x256xf32>
    %c0_9 = arith.constant 0 : index
    %c0_10 = arith.constant 0 : index
    %17 = vector.load %arg4[%c0_9, %c0_10] : memref<16x256xf32, #tpu.memory_space<vmem>>, vector<1x256xf32>
    %18 = vector.broadcast %17 : vector<1x256xf32> to vector<8x256xf32>
    %19 = arith.mulf %16, %18 : vector<8x256xf32>
    %20 = arith.addf %15, %19 : vector<8x256xf32>
    %21 = vector.extract_strided_slice %11 {offsets = [8, 0], sizes = [8, 256], strides = [1, 1]} : vector<128x256xf32> to vector<8x256xf32>
    %c1 = arith.constant 1 : index
    %c0_11 = arith.constant 0 : index
    %22 = vector.load %arg4[%c1, %c0_11] : memref<16x256xf32, #tpu.memory_space<vmem>>, vector<1x256xf32>
    %23 = vector.broadcast %22 : vector<1x256xf32> to vector<8x256xf32>
    %24 = arith.mulf %21, %23 : vector<8x256xf32>
    %25 = arith.addf %20, %24 : vector<8x256xf32>
    %26 = vector.extract_strided_slice %11 {offsets = [16, 0], sizes = [8, 256], strides = [1, 1]} : vector<128x256xf32> to vector<8x256xf32>
    %c2 = arith.constant 2 : index
    %c0_12 = arith.constant 0 : index
    %27 = vector.load %arg4[%c2, %c0_12] : memref<16x256xf32, #tpu.memory_space<vmem>>, vector<1x256xf32>
    %28 = vector.broadcast %27 : vector<1x256xf32> to vector<8x256xf32>
    %29 = arith.mulf %26, %28 : vector<8x256xf32>
    %30 = arith.addf %25, %29 : vector<8x256xf32>
    %31 = vector.extract_strided_slice %11 {offsets = [24, 0], sizes = [8, 256], strides = [1, 1]} : vector<128x256xf32> to vector<8x256xf32>
    %c3 = arith.constant 3 : index
    %c0_13 = arith.constant 0 : index
    %32 = vector.load %arg4[%c3, %c0_13] : memref<16x256xf32, #tpu.memory_space<vmem>>, vector<1x256xf32>
    %33 = vector.broadcast %32 : vector<1x256xf32> to vector<8x256xf32>
    %34 = arith.mulf %31, %33 : vector<8x256xf32>
    %35 = arith.addf %30, %34 : vector<8x256xf32>
    %36 = vector.extract_strided_slice %11 {offsets = [32, 0], sizes = [8, 256], strides = [1, 1]} : vector<128x256xf32> to vector<8x256xf32>
    %c4 = arith.constant 4 : index
    %c0_14 = arith.constant 0 : index
    %37 = vector.load %arg4[%c4, %c0_14] : memref<16x256xf32, #tpu.memory_space<vmem>>, vector<1x256xf32>
    %38 = vector.broadcast %37 : vector<1x256xf32> to vector<8x256xf32>
    %39 = arith.mulf %36, %38 : vector<8x256xf32>
    %40 = arith.addf %35, %39 : vector<8x256xf32>
    %41 = vector.extract_strided_slice %11 {offsets = [40, 0], sizes = [8, 256], strides = [1, 1]} : vector<128x256xf32> to vector<8x256xf32>
    %c5 = arith.constant 5 : index
    %c0_15 = arith.constant 0 : index
    %42 = vector.load %arg4[%c5, %c0_15] : memref<16x256xf32, #tpu.memory_space<vmem>>, vector<1x256xf32>
    %43 = vector.broadcast %42 : vector<1x256xf32> to vector<8x256xf32>
    %44 = arith.mulf %41, %43 : vector<8x256xf32>
    %45 = arith.addf %40, %44 : vector<8x256xf32>
    %46 = vector.extract_strided_slice %11 {offsets = [48, 0], sizes = [8, 256], strides = [1, 1]} : vector<128x256xf32> to vector<8x256xf32>
    %c6 = arith.constant 6 : index
    %c0_16 = arith.constant 0 : index
    %47 = vector.load %arg4[%c6, %c0_16] : memref<16x256xf32, #tpu.memory_space<vmem>>, vector<1x256xf32>
    %48 = vector.broadcast %47 : vector<1x256xf32> to vector<8x256xf32>
    %49 = arith.mulf %46, %48 : vector<8x256xf32>
    %50 = arith.addf %45, %49 : vector<8x256xf32>
    %51 = vector.extract_strided_slice %11 {offsets = [56, 0], sizes = [8, 256], strides = [1, 1]} : vector<128x256xf32> to vector<8x256xf32>
    %c7 = arith.constant 7 : index
    %c0_17 = arith.constant 0 : index
    %52 = vector.load %arg4[%c7, %c0_17] : memref<16x256xf32, #tpu.memory_space<vmem>>, vector<1x256xf32>
    %53 = vector.broadcast %52 : vector<1x256xf32> to vector<8x256xf32>
    %54 = arith.mulf %51, %53 : vector<8x256xf32>
    %55 = arith.addf %50, %54 : vector<8x256xf32>
    %56 = vector.extract_strided_slice %11 {offsets = [64, 0], sizes = [8, 256], strides = [1, 1]} : vector<128x256xf32> to vector<8x256xf32>
    %c8 = arith.constant 8 : index
    %c0_18 = arith.constant 0 : index
    %57 = vector.load %arg4[%c8, %c0_18] : memref<16x256xf32, #tpu.memory_space<vmem>>, vector<1x256xf32>
    %58 = vector.broadcast %57 : vector<1x256xf32> to vector<8x256xf32>
    %59 = arith.mulf %56, %58 : vector<8x256xf32>
    %60 = arith.addf %55, %59 : vector<8x256xf32>
    %61 = vector.extract_strided_slice %11 {offsets = [72, 0], sizes = [8, 256], strides = [1, 1]} : vector<128x256xf32> to vector<8x256xf32>
    %c9 = arith.constant 9 : index
    %c0_19 = arith.constant 0 : index
    %62 = vector.load %arg4[%c9, %c0_19] : memref<16x256xf32, #tpu.memory_space<vmem>>, vector<1x256xf32>
    %63 = vector.broadcast %62 : vector<1x256xf32> to vector<8x256xf32>
    %64 = arith.mulf %61, %63 : vector<8x256xf32>
    %65 = arith.addf %60, %64 : vector<8x256xf32>
    %66 = vector.extract_strided_slice %11 {offsets = [80, 0], sizes = [8, 256], strides = [1, 1]} : vector<128x256xf32> to vector<8x256xf32>
    %c10 = arith.constant 10 : index
    %c0_20 = arith.constant 0 : index
    %67 = vector.load %arg4[%c10, %c0_20] : memref<16x256xf32, #tpu.memory_space<vmem>>, vector<1x256xf32>
    %68 = vector.broadcast %67 : vector<1x256xf32> to vector<8x256xf32>
    %69 = arith.mulf %66, %68 : vector<8x256xf32>
    %70 = arith.addf %65, %69 : vector<8x256xf32>
    %71 = vector.extract_strided_slice %11 {offsets = [88, 0], sizes = [8, 256], strides = [1, 1]} : vector<128x256xf32> to vector<8x256xf32>
    %c11 = arith.constant 11 : index
    %c0_21 = arith.constant 0 : index
    %72 = vector.load %arg4[%c11, %c0_21] : memref<16x256xf32, #tpu.memory_space<vmem>>, vector<1x256xf32>
    %73 = vector.broadcast %72 : vector<1x256xf32> to vector<8x256xf32>
    %74 = arith.mulf %71, %73 : vector<8x256xf32>
    %75 = arith.addf %70, %74 : vector<8x256xf32>
    %76 = vector.extract_strided_slice %11 {offsets = [96, 0], sizes = [8, 256], strides = [1, 1]} : vector<128x256xf32> to vector<8x256xf32>
    %c12 = arith.constant 12 : index
    %c0_22 = arith.constant 0 : index
    %77 = vector.load %arg4[%c12, %c0_22] : memref<16x256xf32, #tpu.memory_space<vmem>>, vector<1x256xf32>
    %78 = vector.broadcast %77 : vector<1x256xf32> to vector<8x256xf32>
    %79 = arith.mulf %76, %78 : vector<8x256xf32>
    %80 = arith.addf %75, %79 : vector<8x256xf32>
    %81 = vector.extract_strided_slice %11 {offsets = [104, 0], sizes = [8, 256], strides = [1, 1]} : vector<128x256xf32> to vector<8x256xf32>
    %c13 = arith.constant 13 : index
    %c0_23 = arith.constant 0 : index
    %82 = vector.load %arg4[%c13, %c0_23] : memref<16x256xf32, #tpu.memory_space<vmem>>, vector<1x256xf32>
    %83 = vector.broadcast %82 : vector<1x256xf32> to vector<8x256xf32>
    %84 = arith.mulf %81, %83 : vector<8x256xf32>
    %85 = arith.addf %80, %84 : vector<8x256xf32>
    %86 = vector.extract_strided_slice %11 {offsets = [112, 0], sizes = [8, 256], strides = [1, 1]} : vector<128x256xf32> to vector<8x256xf32>
    %c14 = arith.constant 14 : index
    %c0_24 = arith.constant 0 : index
    %87 = vector.load %arg4[%c14, %c0_24] : memref<16x256xf32, #tpu.memory_space<vmem>>, vector<1x256xf32>
    %88 = vector.broadcast %87 : vector<1x256xf32> to vector<8x256xf32>
    %89 = arith.mulf %86, %88 : vector<8x256xf32>
    %90 = arith.addf %85, %89 : vector<8x256xf32>
    %91 = vector.extract_strided_slice %11 {offsets = [120, 0], sizes = [8, 256], strides = [1, 1]} : vector<128x256xf32> to vector<8x256xf32>
    %c15 = arith.constant 15 : index
    %c0_25 = arith.constant 0 : index
    %92 = vector.load %arg4[%c15, %c0_25] : memref<16x256xf32, #tpu.memory_space<vmem>>, vector<1x256xf32>
    %93 = vector.broadcast %92 : vector<1x256xf32> to vector<8x256xf32>
    %94 = arith.mulf %91, %93 : vector<8x256xf32>
    %95 = arith.addf %90, %94 : vector<8x256xf32>
    %96 = arith.negf %95 : vector<8x256xf32>
    %97 = math.exp %96 : vector<8x256xf32>
    %cst_26 = arith.constant 1.000000e+00 : f32
    %98 = vector.broadcast %cst_26 : f32 to vector<8x256xf32>
    %99 = arith.addf %98, %97 : vector<8x256xf32>
    %100 = arith.divf %98, %99 : vector<8x256xf32>
    %c0_27 = arith.constant 0 : index
    %c0_28 = arith.constant 0 : index
    %c0_29 = arith.constant 0 : index
    %101 = vector.load %arg6[%c0_27, %c0_28, %c0_29] : memref<1x8x256xf32, #tpu.memory_space<vmem>>, vector<1x8x256xf32>
    %102 = vector.shape_cast %101 : vector<1x8x256xf32> to vector<8x256xf32>
    %103 = vector.shape_cast %100 : vector<8x256xf32> to vector<1x8x256xf32>
    tpu.vector_store %arg6[%c0_27, %c0_28, %c0_29], %103 {strides = array<i32>} : memref<1x8x256xf32, #tpu.memory_space<vmem>>, vector<1x8x256xf32>,
    return
  }
  func.func @transform_0(%arg0: i32) -> (i32, i32, i32) {
    %c0_i32 = arith.constant 0 : i32
    %c0_i32_0 = arith.constant 0 : i32
    %c0_i32_1 = arith.constant 0 : i32
    return %arg0, %c0_i32, %c0_i32_0 : i32, i32, i32
  }
  func.func @transform_1(%arg0: i32) -> (i32, i32, i32) {
    %c0_i32 = arith.constant 0 : i32
    %c0_i32_0 = arith.constant 0 : i32
    %c0_i32_1 = arith.constant 0 : i32
    return %arg0, %c0_i32, %c0_i32_0 : i32, i32, i32
  }
  func.func @transform_2(%arg0: i32) -> (i32, i32) {
    %c0_i32 = arith.constant 0 : i32
    %c0_i32_0 = arith.constant 0 : i32
    %c0_i32_1 = arith.constant 0 : i32
    return %c0_i32, %c0_i32_0 : i32, i32
  }
  func.func @transform_3(%arg0: i32) -> (i32, i32) {
    %c0_i32 = arith.constant 0 : i32
    %c0_i32_0 = arith.constant 0 : i32
    %c0_i32_1 = arith.constant 0 : i32
    return %c0_i32, %c0_i32_0 : i32, i32
  }
  func.func @transform_4(%arg0: i32) -> (i32, i32) {
    %c0_i32 = arith.constant 0 : i32
    %c0_i32_0 = arith.constant 0 : i32
    %c0_i32_1 = arith.constant 0 : i32
    return %c0_i32, %c0_i32_0 : i32, i32
  }
  func.func @transform_5(%arg0: i32) -> (i32, i32, i32) {
    %c0_i32 = arith.constant 0 : i32
    %c0_i32_0 = arith.constant 0 : i32
    %c0_i32_1 = arith.constant 0 : i32
    return %arg0, %c0_i32, %c0_i32_0 : i32, i32, i32
  }
}

</mosaic_0001>

<llo_original>
// kernel: model_forward.1
$region0: #{model_forward.1}
  #allocation0 [shape = 'u32[]', space=smem, size = 0x4, offset = 0x4, fixed_abs, tag = 'smem constant byte address 0x4 - core index']
  #allocation1 [shape = 'u32[144,128]{1,0:T(1,128)}', space=vmem, size = 0x12000, scoped, tag = 'internal scratch']
  %s0 = inlined_call_operand.vmem [shape: f32[2,24,352], index: 0, kind: input, shape index: {}]
  %s1 = inlined_call_operand.vmem [shape: f32[2,8,256], index: 1, kind: input, shape index: {}]
  %s2 = inlined_call_operand.vmem [shape: f32[128,168], index: 2, kind: input, shape index: {}]
  %s3 = inlined_call_operand.vmem [shape: f32[16,256], index: 3, kind: input, shape index: {}]
  %s4 = inlined_call_operand.vmem [shape: f32[8,256], index: 4, kind: input, shape index: {}]
  %s5 = inlined_call_operand.vmem [shape: f32[2,8,256], index: 5, kind: output, shape index: {}]
  %s6 = sld [smem:[#allocation0]]
  $region53: #{model_forward.1} parent=0
    _
  %s8 = ssub.s32 1, %s6
  %s9 = scalar_select 0, %s8, %s6
  loop: start=0, step=1, limit=4
  $region2: #{model_forward.1} parent=0 // loop_pre_header
    _
  $region3: #{model_forward.1} parent=0 // loop_header
    %s11 = sphi 0, %s15
    %p12 = scmp.ge.s32.totalorder %s11, 4
    %s21 = sphi 0, %s23
    %s24 = sphi 0, %s21
    %s25 = sphi 0, %s24
    %s41 = sphi 0, %s25
    %s47 = sphi 0, %s49
    %s50 = sphi 0, %s47
    %s51 = sphi 0, %s50
    %s67 = sphi 0, %s51
    %s71 = sphi 0, %s71
    %s73 = sphi 0, %s71
    %s74 = sphi 0, %s73
    %s88 = sphi 0, %s74
    %s92 = sphi 0, %s92
    %s94 = sphi 0, %s92
    %s95 = sphi 0, %s94
    %s109 = sphi 0, %s95
    %s113 = sphi 0, %s113
    %s115 = sphi 0, %s113
    %s116 = sphi 0, %s115
    %s130 = sphi 0, %s116
    %s136 = sphi 0, %s138
    %s139 = sphi 0, %s136
    %s140 = sphi 0, %s139
    %s156 = sphi 0, %s140
  $region4: #{model_forward.1} parent=0 // loop_header_branch
    %14 = sbr.rel (%p12) target = $region8
  $region5: #{model_forward.1} parent=0 // loop_body
    %s16 = ssub.s32 %s11, 1
    %s17 = ssub.s32 %s11, 2
    %s18 = sadd.s32 %s11, 1
    %s19 = ssub.s32 %s11, %s18
    %p20 = scmp.eq.s32.totalorder %s19, 0
    %s22 = sadd.s32 %s21, 1
    %s23 = scalar_select %p20, %s21, %s22
    %p26 = pneg %p20
    %p27 = scmp.eq.s32.totalorder %s11, 1
    %p28 = por %p26, %p27
    %p29 = scmp.ne.s32.totalorder %s21, %s24
    %p30 = scmp.eq.s32.totalorder %s11, 0
    %p31 = por %p29, %p30
    %p32 = scmp.ne.s32.totalorder %s21, %s24
    %p33 = scmp.eq.s32.totalorder %s16, 1
    %p34 = por %p32, %p33
    %p35 = scmp.ne.s32.totalorder %s24, %s25
    %p36 = scmp.eq.s32.totalorder %s16, 0
    %p37 = por %p35, %p36
    %p38 = scmp.ne.s32.totalorder %s24, %s25
    %p39 = scmp.eq.s32.totalorder %s17, 1
    %p40 = por %p38, %p39
    %p42 = scmp.ne.s32.totalorder %s25, %s41
    %p43 = scmp.eq.s32.totalorder %s17, 0
    %p44 = por %p42, %p43
    %s45 = ssub.s32 %s11, %s18
    %p46 = scmp.eq.s32.totalorder %s45, 0
    %s48 = sadd.s32 %s47, 1
    %s49 = scalar_select %p46, %s47, %s48
    %p52 = pneg %p46
    %p53 = scmp.eq.s32.totalorder %s11, 1
    %p54 = por %p52, %p53
    %p55 = scmp.ne.s32.totalorder %s47, %s50
    %p56 = scmp.eq.s32.totalorder %s11, 0
    %p57 = por %p55, %p56
    %p58 = scmp.ne.s32.totalorder %s47, %s50
    %p59 = scmp.eq.s32.totalorder %s16, 1
    %p60 = por %p58, %p59
    %p61 = scmp.ne.s32.totalorder %s50, %s51
    %p62 = scmp.eq.s32.totalorder %s16, 0
    %p63 = por %p61, %p62
    %p64 = scmp.ne.s32.totalorder %s50, %s51
    %p65 = scmp.eq.s32.totalorder %s17, 1
    %p66 = por %p64, %p65
    %p68 = scmp.ne.s32.totalorder %s51, %s67
    %p69 = scmp.eq.s32.totalorder %s17, 0
    %p70 = por %p68, %p69
    %s72 = sadd.s32 %s71, 1
    %p75 = scmp.eq.s32.totalorder %s11, 1
    %p76 = scmp.ne.s32.totalorder %s71, %s73
    %p77 = scmp.eq.s32.totalorder %s11, 0
    %p78 = por %p76, %p77
    %p79 = scmp.ne.s32.totalorder %s71, %s73
    %p80 = scmp.eq.s32.totalorder %s16, 1
    %p81 = por %p79, %p80
    %p82 = scmp.ne.s32.totalorder %s73, %s74
    %p83 = scmp.eq.s32.totalorder %s16, 0
    %p84 = por %p82, %p83
    %p85 = scmp.ne.s32.totalorder %s73, %s74
    %p86 = scmp.eq.s32.totalorder %s17, 1
    %p87 = por %p85, %p86
    %p89 = scmp.ne.s32.totalorder %s74, %s88
    %p90 = scmp.eq.s32.totalorder %s17, 0
    %p91 = por %p89, %p90
    %s93 = sadd.s32 %s92, 1
    %p96 = scmp.eq.s32.totalorder %s11, 1
    %p97 = scmp.ne.s32.totalorder %s92, %s94
    %p98 = scmp.eq.s32.totalorder %s11, 0
    %p99 = por %p97, %p98
    %p100 = scmp.ne.s32.totalorder %s92, %s94
    %p101 = scmp.eq.s32.totalorder %s16, 1
    %p102 = por %p100, %p101
    %p103 = scmp.ne.s32.totalorder %s94, %s95
    %p104 = scmp.eq.s32.totalorder %s16, 0
    %p105 = por %p103, %p104
    %p106 = scmp.ne.s32.totalorder %s94, %s95
    %p107 = scmp.eq.s32.totalorder %s17, 1
    %p108 = por %p106, %p107
    %p110 = scmp.ne.s32.totalorder %s95, %s109
    %p111 = scmp.eq.s32.totalorder %s17, 0
    %p112 = por %p110, %p111
    %s114 = sadd.s32 %s113, 1
    %p117 = scmp.eq.s32.totalorder %s11, 1
    %p118 = scmp.ne.s32.totalorder %s113, %s115
    %p119 = scmp.eq.s32.totalorder %s11, 0
    %p120 = por %p118, %p119
    %p121 = scmp.ne.s32.totalorder %s113, %s115
    %p122 = scmp.eq.s32.totalorder %s16, 1
    %p123 = por %p121, %p122
    %p124 = scmp.ne.s32.totalorder %s115, %s116
    %p125 = scmp.eq.s32.totalorder %s16, 0
    %p126 = por %p124, %p125
    %p127 = scmp.ne.s32.totalorder %s115, %s116
    %p128 = scmp.eq.s32.totalorder %s17, 1
    %p129 = por %p127, %p128
    %p131 = scmp.ne.s32.totalorder %s116, %s130
    %p132 = scmp.eq.s32.totalorder %s17, 0
    %p133 = por %p131, %p132
    %s134 = ssub.s32 %s11, %s18
    %p135 = scmp.eq.s32.totalorder %s134, 0
    %s137 = sadd.s32 %s136, 1
    %s138 = scalar_select %p135, %s136, %s137
    %p141 = pneg %p135
    %p142 = scmp.eq.s32.totalorder %s11, 1
    %p143 = por %p141, %p142
    %p144 = scmp.ne.s32.totalorder %s136, %s139
    %p145 = scmp.eq.s32.totalorder %s11, 0
    %p146 = por %p144, %p145
    %p147 = scmp.ne.s32.totalorder %s136, %s139
    %p148 = scmp.eq.s32.totalorder %s16, 1
    %p149 = por %p147, %p148
    %p150 = scmp.ne.s32.totalorder %s139, %s140
    %p151 = scmp.eq.s32.totalorder %s16, 0
    %p152 = por %p150, %p151
    %p153 = scmp.ne.s32.totalorder %s139, %s140
    %p154 = scmp.eq.s32.totalorder %s17, 1
    %p155 = por %p153, %p154
    %p157 = scmp.ne.s32.totalorder %s140, %s156
    %p158 = scmp.eq.s32.totalorder %s17, 0
    %p159 = por %p157, %p158
    %p160 = scmp.le.s32.totalorder 1, %s11
    %p161 = scmp.lt.s32.totalorder %s11, 3
    %p162 = pnand %p160, %p161
    %p163 = pneg %p162
    // Predicated region
    $region9: #{model_forward.1} parent=5 // pred_check
      _
    $region10: #{model_forward.1} parent=5 // pred_check_branch
      %165 = sbr.rel (%p162) target = $region12
    $region11: #{model_forward.1} parent=5 // pred_region
      %s166 = ssub.s32 %s11, 1
      // Predicated region
      $region13: #{model_forward.1} parent=11 // pred_check
        %p167 = pneg %p84
      $region14: #{model_forward.1} parent=11 // pred_check_branch
        %169 = sbr.rel (%p167) target = $region16
      $region15: #{model_forward.1} parent=11 // pred_region
        _
      $region16: #{model_forward.1} parent=11 // pred_fallthru
        _
      // Predicated region
      $region17: #{model_forward.1} parent=11 // pred_check
        %p170 = pneg %p105
      $region18: #{model_forward.1} parent=11 // pred_check_branch
        %172 = sbr.rel (%p170) target = $region20
      $region19: #{model_forward.1} parent=11 // pred_region
        _
      $region20: #{model_forward.1} parent=11 // pred_fallthru
        _
      // Predicated region
      $region21: #{model_forward.1} parent=11 // pred_check
        %p173 = pneg %p126
      $region22: #{model_forward.1} parent=11 // pred_check_branch
        %175 = sbr.rel (%p173) target = $region24
      $region23: #{model_forward.1} parent=11 // pred_region
        _
      $region24: #{model_forward.1} parent=11 // pred_fallthru
        _
    $region12: #{model_forward.1} parent=5 // pred_fallthru
      _
    %p176 = scmp.lt.s32.totalorder %s11, 2
    // Predicated region
    $region25: #{model_forward.1} parent=5 // pred_check
      %p177 = pneg %p176
    $region26: #{model_forward.1} parent=5 // pred_check_branch
      %179 = sbr.rel (%p177) target = $region28
    $region27: #{model_forward.1} parent=5 // pred_region
      // Predicated region
      $region29: #{model_forward.1} parent=27 // pred_check
        %p180 = pneg %p31
      $region30: #{model_forward.1} parent=27 // pred_check_branch
        %182 = sbr.rel (%p180) target = $region32
      $region31: #{model_forward.1} parent=27 // pred_region
        %p183 = scmp.lt.s32.totalorder %s11, 1
        %s184 = scalar_select %p183, %s11, 1
        %s185 = smul.addr %s184, 9
        %s186 = smul.addr %s185, 8
        %s187 = scalar_lea.vmem %s0, %s186
      $region32: #{model_forward.1} parent=27 // pred_fallthru
        _
      // Predicated region
      $region33: #{model_forward.1} parent=27 // pred_check
        %p188 = pneg %p57
      $region34: #{model_forward.1} parent=27 // pred_check_branch
        %190 = sbr.rel (%p188) target = $region36
      $region35: #{model_forward.1} parent=27 // pred_region
        %p191 = scmp.lt.s32.totalorder %s11, 1
        %s192 = scalar_select %p191, %s11, 1
        %s193 = smul.addr %s192, 2
        %s194 = smul.addr %s193, 8
        %s195 = scalar_lea.vmem %s1, %s194
      $region36: #{model_forward.1} parent=27 // pred_fallthru
        _
    $region28: #{model_forward.1} parent=5 // pred_fallthru
      _
    %p196 = scmp.le.s32.totalorder 1, %s11
    %p197 = scmp.lt.s32.totalorder %s11, 3
    %p198 = pnand %p196, %p197
    %p199 = pneg %p198
    // Predicated region
    $region37: #{model_forward.1} parent=5 // pred_check
      _
    $region38: #{model_forward.1} parent=5 // pred_check_branch
      %201 = sbr.rel (%p198) target = $region40
    $region39: #{model_forward.1} parent=5 // pred_region
      %s202 = ssub.s32 %s11, 1
      %p203 = scmp.lt.s32.totalorder %s16, 1
      %s204 = scalar_select %p203, %s16, 1
      %s205 = smul.addr %s204, 9
      %s206 = smul.addr %s205, 8
      %s207 = scalar_lea.vmem %s0, %s206
      %p208 = pneg %p37
      %p209 = pneg %p34
      %p210 = scmp.lt.s32.totalorder %s16, 1
      %s211 = scalar_select %p210, %s16, 1
      %s212 = smul.addr %s211, 2
      %s213 = smul.addr %s212, 8
      %s214 = scalar_lea.vmem %s1, %s213
      %p215 = pneg %p63
      %p216 = pneg %p60
      %p217 = pneg %p84
      %p218 = pneg %p81
      %p219 = pneg %p105
      %p220 = pneg %p102
      %p221 = pneg %p126
      %p222 = pneg %p123
      %p223 = pneg %p152
      %p224 = pneg %p149
      %p225 = scmp.lt.s32.totalorder %s16, 1
      %s226 = scalar_select %p225, %s16, 1
      %s227 = smul.addr %s226, 2
      %s228 = smul.addr %s227, 8
      %s229 = scalar_lea.vmem %s5, %s228
      %p230 = scmp.lt.s32.totalorder %s16, 1
      %s231 = scalar_select %p230, %s16, 1
      %s232 = smul.addr %s231, 9
      %s233 = smul.addr %s232, 8
      %s234 = scalar_lea.vmem %s0, %s233
      %p235 = scmp.lt.s32.totalorder %s16, 1
      %s236 = scalar_select %p235, %s16, 1
      %s237 = smul.addr %s236, 2
      %s238 = smul.addr %s237, 8
      %s239 = scalar_lea.vmem %s1, %s238
      %p240 = scmp.lt.s32.totalorder %s16, 1
      %s241 = scalar_select %p240, %s16, 1
      %s242 = smul.addr %s241, 2
      %s243 = smul.addr %s242, 8
      %s244 = scalar_lea.vmem %s5, %s243
      %v245 = vld [vmem:[%s234] sm:$0xff]
      %v246 = vld [vmem:[%s234 + $0x8] sm:$0xff]
      %v247 = vld [vmem:[%s234 + $0x10] sm:$0xff]
      %v248 = vld [vmem:[%s234 + $0x18] sm:$0xff]
      %v249 = vld [vmem:[%s234 + $0x20] sm:$0xff]
      %v250 = vld [vmem:[%s234 + $0x28] sm:$0xff]
      %v251 = vld [vmem:[%s234 + $0x30] sm:$0xff]
      %v252 = vld [vmem:[%s234 + $0x38] sm:$0xff]
      %v253 = vld [vmem:[%s234 + $0x40] sm:$0xff]
      %263 = vrot.lane.b32.xlu0 %v245, 112
      %v264 = vpop.permute.xlu0 %263
      %265 = vrot.lane.b32.xlu0 %v246, 112
      %v266 = vpop.permute.xlu0 %265
      %267 = vrot.lane.b32.xlu0 %v247, 112
      %v268 = vpop.permute.xlu0 %267
      %269 = vrot.lane.b32.xlu0 %v248, 112
      %v270 = vpop.permute.xlu0 %269
      %271 = vrot.lane.b32.xlu0 %v249, 112
      %v272 = vpop.permute.xlu0 %271
      %273 = vrot.lane.b32.xlu0 %v250, 112
      %v274 = vpop.permute.xlu0 %273
      %275 = vrot.lane.b32.xlu0 %v251, 112
      %v276 = vpop.permute.xlu0 %275
      %277 = vrot.lane.b32.xlu0 %v252, 112
      %v278 = vpop.permute.xlu0 %277
      %279 = vrot.lane.b32.xlu0 %v253, 112
      %v280 = vpop.permute.xlu0 %279
      %vm281 = vcmask 916480
      %v282 = vsel %vm281, %v264, %v266
      %v283 = vsel %vm281, %v266, %v268
      %v284 = vsel %vm281, %v270, %v272
      %v285 = vsel %vm281, %v272, %v274
      %v286 = vsel %vm281, %v276, %v278
      %v287 = vsel %vm281, %v278, %v280
      %294 = vrot.lane.b32.xlu0 %v245, 96
      %v295 = vpop.permute.xlu0 %294
      %296 = vrot.lane.b32.xlu0 %v246, 96
      %v297 = vpop.permute.xlu0 %296
      %298 = vrot.lane.b32.xlu0 %v247, 96
      %v299 = vpop.permute.xlu0 %298
      %300 = vrot.lane.b32.xlu0 %v248, 96
      %v301 = vpop.permute.xlu0 %300
      %302 = vrot.lane.b32.xlu0 %v249, 96
      %v303 = vpop.permute.xlu0 %302
      %304 = vrot.lane.b32.xlu0 %v250, 96
      %v305 = vpop.permute.xlu0 %304
      %306 = vrot.lane.b32.xlu0 %v251, 96
      %v307 = vpop.permute.xlu0 %306
      %308 = vrot.lane.b32.xlu0 %v252, 96
      %v309 = vpop.permute.xlu0 %308
      %310 = vrot.lane.b32.xlu0 %v253, 96
      %v311 = vpop.permute.xlu0 %310
      %vm312 = vcmask 785408
      %v313 = vsel %vm312, %v295, %v297
      %v314 = vsel %vm312, %v297, %v299
      %v315 = vsel %vm312, %v301, %v303
      %v316 = vsel %vm312, %v303, %v305
      %v317 = vsel %vm312, %v307, %v309
      %v318 = vsel %vm312, %v309, %v311
      %325 = vrot.lane.b32.xlu0 %v245, 80
      %v326 = vpop.permute.xlu0 %325
      %327 = vrot.lane.b32.xlu0 %v246, 80
      %v328 = vpop.permute.xlu0 %327
      %329 = vrot.lane.b32.xlu0 %v247, 80
      %v330 = vpop.permute.xlu0 %329
      %331 = vrot.lane.b32.xlu0 %v248, 80
      %v332 = vpop.permute.xlu0 %331
      %333 = vrot.lane.b32.xlu0 %v249, 80
      %v334 = vpop.permute.xlu0 %333
      %335 = vrot.lane.b32.xlu0 %v250, 80
      %v336 = vpop.permute.xlu0 %335
      %337 = vrot.lane.b32.xlu0 %v251, 80
      %v338 = vpop.permute.xlu0 %337
      %339 = vrot.lane.b32.xlu0 %v252, 80
      %v340 = vpop.permute.xlu0 %339
      %341 = vrot.lane.b32.xlu0 %v253, 80
      %v342 = vpop.permute.xlu0 %341
      %vm343 = vcmask 654336
      %v344 = vsel %vm343, %v326, %v328
      %v345 = vsel %vm343, %v328, %v330
      %v346 = vsel %vm343, %v332, %v334
      %v347 = vsel %vm343, %v334, %v336
      %v348 = vsel %vm343, %v338, %v340
      %v349 = vsel %vm343, %v340, %v342
      %356 = vrot.lane.b32.xlu0 %v245, 64
      %v357 = vpop.permute.xlu0 %356
      %358 = vrot.lane.b32.xlu0 %v246, 64
      %v359 = vpop.permute.xlu0 %358
      %360 = vrot.lane.b32.xlu0 %v247, 64
      %v361 = vpop.permute.xlu0 %360
      %362 = vrot.lane.b32.xlu0 %v248, 64
      %v363 = vpop.permute.xlu0 %362
      %364 = vrot.lane.b32.xlu0 %v249, 64
      %v365 = vpop.permute.xlu0 %364
      %366 = vrot.lane.b32.xlu0 %v250, 64
      %v367 = vpop.permute.xlu0 %366
      %368 = vrot.lane.b32.xlu0 %v251, 64
      %v369 = vpop.permute.xlu0 %368
      %370 = vrot.lane.b32.xlu0 %v252, 64
      %v371 = vpop.permute.xlu0 %370
      %372 = vrot.lane.b32.xlu0 %v253, 64
      %v373 = vpop.permute.xlu0 %372
      %vm374 = vcmask 523264
      %v375 = vsel %vm374, %v357, %v359
      %v376 = vsel %vm374, %v359, %v361
      %v377 = vsel %vm374, %v363, %v365
      %v378 = vsel %vm374, %v365, %v367
      %v379 = vsel %vm374, %v369, %v371
      %v380 = vsel %vm374, %v371, %v373
      %387 = vrot.lane.b32.xlu0 %v245, 48
      %v388 = vpop.permute.xlu0 %387
      %389 = vrot.lane.b32.xlu0 %v246, 48
      %v390 = vpop.permute.xlu0 %389
      %391 = vrot.lane.b32.xlu0 %v247, 48
      %v392 = vpop.permute.xlu0 %391
      %393 = vrot.lane.b32.xlu0 %v248, 48
      %v394 = vpop.permute.xlu0 %393
      %395 = vrot.lane.b32.xlu0 %v249, 48
      %v396 = vpop.permute.xlu0 %395
      %397 = vrot.lane.b32.xlu0 %v250, 48
      %v398 = vpop.permute.xlu0 %397
      %399 = vrot.lane.b32.xlu0 %v251, 48
      %v400 = vpop.permute.xlu0 %399
      %401 = vrot.lane.b32.xlu0 %v252, 48
      %v402 = vpop.permute.xlu0 %401
      %403 = vrot.lane.b32.xlu0 %v253, 48
      %v404 = vpop.permute.xlu0 %403
      %vm405 = vcmask 392192
      %v406 = vsel %vm405, %v388, %v390
      %v407 = vsel %vm405, %v390, %v392
      %v408 = vsel %vm405, %v394, %v396
      %v409 = vsel %vm405, %v396, %v398
      %v410 = vsel %vm405, %v400, %v402
      %v411 = vsel %vm405, %v402, %v404
      %418 = vrot.lane.b32.xlu0 %v245, 32
      %v419 = vpop.permute.xlu0 %418
      %420 = vrot.lane.b32.xlu0 %v246, 32
      %v421 = vpop.permute.xlu0 %420
      %422 = vrot.lane.b32.xlu0 %v247, 32
      %v423 = vpop.permute.xlu0 %422
      %424 = vrot.lane.b32.xlu0 %v248, 32
      %v425 = vpop.permute.xlu0 %424
      %426 = vrot.lane.b32.xlu0 %v249, 32
      %v427 = vpop.permute.xlu0 %426
      %428 = vrot.lane.b32.xlu0 %v250, 32
      %v429 = vpop.permute.xlu0 %428
      %430 = vrot.lane.b32.xlu0 %v251, 32
      %v431 = vpop.permute.xlu0 %430
      %432 = vrot.lane.b32.xlu0 %v252, 32
      %v433 = vpop.permute.xlu0 %432
      %434 = vrot.lane.b32.xlu0 %v253, 32
      %v435 = vpop.permute.xlu0 %434
      %vm436 = vcmask 261120
      %v437 = vsel %vm436, %v419, %v421
      %v438 = vsel %vm436, %v421, %v423
      %v439 = vsel %vm436, %v425, %v427
      %v440 = vsel %vm436, %v427, %v429
      %v441 = vsel %vm436, %v431, %v433
      %v442 = vsel %vm436, %v433, %v435
      %v449 = vld [vmem:[%s2] sm:$0xff]
      %v450 = vld [vmem:[%s2 + $0x8] sm:$0xff]
      %v451 = vld [vmem:[%s2 + $0x10] sm:$0xff]
      %v452 = vld [vmem:[%s2 + $0x18] sm:$0xff]
      %v453 = vld [vmem:[%s2 + $0x20] sm:$0xff]
      %v454 = vld [vmem:[%s2 + $0x28] sm:$0xff]
      %v455 = vld [vmem:[%s2 + $0x30] sm:$0xff]
      %v456 = vld [vmem:[%s2 + $0x38] sm:$0xff]
      %v457 = vld [vmem:[%s2 + $0x40] sm:$0xff]
      %v458 = vld [vmem:[%s2 + $0x48] sm:$0xff]
      %v459 = vld [vmem:[%s2 + $0x50] sm:$0xff]
      %v460 = vld [vmem:[%s2 + $0x58] sm:$0xff]
      %v461 = vld [vmem:[%s2 + $0x60] sm:$0xff]
      %v462 = vld [vmem:[%s2 + $0x68] sm:$0xff]
      %v463 = vld [vmem:[%s2 + $0x70] sm:$0xff]
      %v464 = vld [vmem:[%s2 + $0x78] sm:$0xff]
      %v465 = vld [vmem:[%s2 + $0x80] sm:$0xff]
      %v466 = vld [vmem:[%s2 + $0x88] sm:$0xff]
      %v467 = vld [vmem:[%s2 + $0x90] sm:$0xff]
      %v468 = vld [vmem:[%s2 + $0x98] sm:$0xff]
      %v469 = vld [vmem:[%s2 + $0xa0] sm:$0xff]
      %v470 = vld [vmem:[%s2 + $0xa8] sm:$0xff]
      %v471 = vld [vmem:[%s2 + $0xb0] sm:$0xff]
      %v472 = vld [vmem:[%s2 + $0xb8] sm:$0xff]
      %v473 = vld [vmem:[%s2 + $0xc0] sm:$0xff]
      %v474 = vld [vmem:[%s2 + $0xc8] sm:$0xff]
      %v475 = vld [vmem:[%s2 + $0xd0] sm:$0xff]
      %v476 = vld [vmem:[%s2 + $0xd8] sm:$0xff]
      %v477 = vld [vmem:[%s2 + $0xe0] sm:$0xff]
      %v478 = vld [vmem:[%s2 + $0xe8] sm:$0xff]
      %v479 = vld [vmem:[%s2 + $0xf0] sm:$0xff]
      %v480 = vld [vmem:[%s2 + $0xf8] sm:$0xff]
      %vm481 = vcmask 326656
      %v483 = vsel %vm481, %v450, 0
      %v486 = vsel %vm481, %v452, 0
      %v489 = vsel %vm481, %v454, 0
      %v492 = vsel %vm481, %v456, 0
      %v495 = vsel %vm481, %v458, 0
      %v498 = vsel %vm481, %v460, 0
      %v501 = vsel %vm481, %v462, 0
      %v504 = vsel %vm481, %v464, 0
      %v507 = vsel %vm481, %v466, 0
      %v510 = vsel %vm481, %v468, 0
      %v513 = vsel %vm481, %v470, 0
      %v516 = vsel %vm481, %v472, 0
      %v519 = vsel %vm481, %v474, 0
      %v522 = vsel %vm481, %v476, 0
      %v525 = vsel %vm481, %v478, 0
      %v528 = vsel %vm481, %v480, 0
      %530 = vmatprep.subr.mxu0 %v246
      %531 = vmatpush1.msra.mxu0 %v245
      %532 = vmatprep.subr.mxu0 %v249
      %533 = vmatpush1.msra.mxu0 %v248
      %534 = vmatprep.subr.mxu0 %v252
      %535 = vmatpush1.msra.mxu0 %v251
      %536 = vmatprep.subr.mxu0 %v283
      %537 = vmatpush1.msra.mxu0 %v282
      %538 = vmatprep.subr.mxu0 %v285
      %539 = vmatpush1.msra.mxu0 %v284
      %540 = vmatprep.subr.mxu0 %v287
      %541 = vmatpush1.msra.mxu0 %v286
      %542 = vmatprep.subr.mxu0 %v314
      %543 = vmatpush1.msra.mxu0 %v313
      %544 = vmatprep.subr.mxu0 %v316
      %545 = vmatpush1.msra.mxu0 %v315
      %546 = vmatprep.subr.mxu0 %v318
      %547 = vmatpush1.msra.mxu0 %v317
      %548 = vmatprep.subr.mxu0 %v345
      %549 = vmatpush1.msra.mxu0 %v344
      %550 = vmatprep.subr.mxu0 %v347
      %551 = vmatpush1.msra.mxu0 %v346
      %552 = vmatprep.subr.mxu0 %v349
      %553 = vmatpush1.msra.mxu0 %v348
      %554 = vmatprep.subr.mxu0 %v376
      %555 = vmatpush1.msra.mxu0 %v375
      %556 = vmatprep.subr.mxu0 %v378
      %557 = vmatpush1.msra.mxu0 %v377
      %558 = vmatprep.subr.mxu0 %v380
      %559 = vmatpush1.msra.mxu0 %v379
      %560 = vmatprep.subr.mxu0 %v407
      %561 = vmatpush1.msra.mxu0 %v406
      %562 = vmatprep.subr.mxu0 %v409
      %563 = vmatpush1.msra.mxu0 %v408
      %564 = vmatprep.subr.mxu0 %v411
      %565 = vmatpush1.msra.mxu0 %v410
      %566 = vmatprep.subr.mxu0 %v438
      %567 = vmatpush1.msra.mxu0 %v437
      %568 = vmatprep.subr.mxu0 %v440
      %569 = vmatpush1.msra.mxu0 %v439
      %570 = vmatprep.subr.mxu0 %v442
      %571 = vmatpush1.msra.mxu0 %v441
      %572 = vmatprep.subr.mxu0 0.0
      %573 = vmatpush1.msra.mxu0 0.0
      %574 = vmatprep.subr.mxu0 0.0
      %575 = vmatpush1.msra.mxu0 0.0
      %576 = vmatprep.subr.mxu0 0.0
      %577 = vmatpush1.msra.mxu0 0.0
      %578 = vmatprep.subr.mxu0 0.0
      %579 = vmatpush1.msra.mxu0 0.0
      %580 = vmatprep.subr.mxu0 0.0
      %581 = vmatpush1.msra.mxu0 0.0
      %582 = vmatprep.subr.mxu0 0.0
      %583 = vmatpush1.msra.mxu0 0.0
      %584 = vmatprep.subr.mxu0 0.0
      %585 = vmatpush1.msra.mxu0 0.0
      %586 = vmatprep.subr.mxu0 0.0
      %587 = vmatpush1.msra.mxu0 0.0
      %588 = vmatprep.subr.mxu0 0.0
      %589 = vmatpush1.msra.mxu0 0.0
      %590 = vmatprep.subr.mxu0 0.0
      %591 = vmatpush1.msra.mxu0 0.0
      %592 = vmatprep.subr.mxu0 0.0
      %593 = vmatpush1.msra.mxu0 0.0
      %594 = vmatprep.mubr.f32.mxu0 %v483
      %595 = vmatmul.mubr.f32.gmra.mrb[0].mxu0 %v449
      %v596 = vpop.f32.mrb[0].mxu0
      %v597 = vadd.f32 0.0, %v596
      %v598 = vpop.f32.mrb[0].mxu0
      %v599 = vadd.f32 0.0, %v598
      %600 = vmatprep.mubr.f32.mxu0 %v486
      %601 = vmatmul.mubr.f32.gmra.mrb[0].mxu0 %v451
      %v602 = vpop.f32.mrb[0].mxu0
      %v603 = vadd.f32 0.0, %v602
      %v604 = vpop.f32.mrb[0].mxu0
      %v605 = vadd.f32 0.0, %v604
      %606 = vmatprep.mubr.f32.mxu0 %v489
      %607 = vmatmul.mubr.f32.gmra.mrb[0].mxu0 %v453
      %v608 = vpop.f32.mrb[0].mxu0
      %v609 = vadd.f32 0.0, %v608
      %v610 = vpop.f32.mrb[0].mxu0
      %v611 = vadd.f32 0.0, %v610
      %612 = vmatprep.mubr.f32.mxu0 %v492
      %613 = vmatmul.mubr.f32.gmra.mrb[0].mxu0 %v455
      %v614 = vpop.f32.mrb[0].mxu0
      %v615 = vadd.f32 0.0, %v614
      %v616 = vpop.f32.mrb[0].mxu0
      %v617 = vadd.f32 0.0, %v616
      %618 = vmatprep.mubr.f32.mxu0 %v495
      %619 = vmatmul.mubr.f32.gmra.mrb[0].mxu0 %v457
      %v620 = vpop.f32.mrb[0].mxu0
      %v621 = vadd.f32 0.0, %v620
      %v622 = vpop.f32.mrb[0].mxu0
      %v623 = vadd.f32 0.0, %v622
      %624 = vmatprep.mubr.f32.mxu0 %v498
      %625 = vmatmul.mubr.f32.gmra.mrb[0].mxu0 %v459
      %v626 = vpop.f32.mrb[0].mxu0
      %v627 = vadd.f32 0.0, %v626
      %v628 = vpop.f32.mrb[0].mxu0
      %v629 = vadd.f32 0.0, %v628
      %630 = vmatprep.mubr.f32.mxu0 %v501
      %631 = vmatmul.mubr.f32.gmra.mrb[0].mxu0 %v461
      %v632 = vpop.f32.mrb[0].mxu0
      %v633 = vadd.f32 0.0, %v632
      %v634 = vpop.f32.mrb[0].mxu0
      %v635 = vadd.f32 0.0, %v634
      %636 = vmatprep.mubr.f32.mxu0 %v504
      %637 = vmatmul.mubr.f32.gmra.mrb[0].mxu0 %v463
      %v638 = vpop.f32.mrb[0].mxu0
      %v639 = vadd.f32 0.0, %v638
      %v640 = vpop.f32.mrb[0].mxu0
      %v641 = vadd.f32 0.0, %v640
      %642 = vmatprep.mubr.f32.mxu0 %v507
      %643 = vmatmul.mubr.f32.gmra.mrb[0].mxu0 %v465
      %v644 = vpop.f32.mrb[0].mxu0
      %v645 = vadd.f32 0.0, %v644
      %v646 = vpop.f32.mrb[0].mxu0
      %v647 = vadd.f32 0.0, %v646
      %648 = vmatprep.mubr.f32.mxu0 %v510
      %649 = vmatmul.mubr.f32.gmra.mrb[0].mxu0 %v467
      %v650 = vpop.f32.mrb[0].mxu0
      %v651 = vadd.f32 0.0, %v650
      %v652 = vpop.f32.mrb[0].mxu0
      %v653 = vadd.f32 0.0, %v652
      %654 = vmatprep.mubr.f32.mxu0 %v513
      %655 = vmatmul.mubr.f32.gmra.mrb[0].mxu0 %v469
      %v656 = vpop.f32.mrb[0].mxu0
      %v657 = vadd.f32 0.0, %v656
      %v658 = vpop.f32.mrb[0].mxu0
      %v659 = vadd.f32 0.0, %v658
      %660 = vmatprep.mubr.f32.mxu0 %v516
      %661 = vmatmul.mubr.f32.gmra.mrb[0].mxu0 %v471
      %v662 = vpop.f32.mrb[0].mxu0
      %v663 = vadd.f32 0.0, %v662
      %v664 = vpop.f32.mrb[0].mxu0
      %v665 = vadd.f32 0.0, %v664
      %666 = vmatprep.mubr.f32.mxu0 %v519
      %667 = vmatmul.mubr.f32.gmra.mrb[0].mxu0 %v473
      %v668 = vpop.f32.mrb[0].mxu0
      %v669 = vadd.f32 0.0, %v668
      %v670 = vpop.f32.mrb[0].mxu0
      %v671 = vadd.f32 0.0, %v670
      %672 = vmatprep.mubr.f32.mxu0 %v522
      %673 = vmatmul.mubr.f32.gmra.mrb[0].mxu0 %v475
      %v674 = vpop.f32.mrb[0].mxu0
      %v675 = vadd.f32 0.0, %v674
      %v676 = vpop.f32.mrb[0].mxu0
      %v677 = vadd.f32 0.0, %v676
      %678 = vmatprep.mubr.f32.mxu0 %v525
      %679 = vmatmul.mubr.f32.gmra.mrb[0].mxu0 %v477
      %v680 = vpop.f32.mrb[0].mxu0
      %v681 = vadd.f32 0.0, %v680
      %v682 = vpop.f32.mrb[0].mxu0
      %v683 = vadd.f32 0.0, %v682
      %684 = vmatprep.mubr.f32.mxu0 %v528
      %685 = vmatmul.mubr.f32.gmra.mrb[0].mxu0 %v479
      %v686 = vpop.f32.mrb[0].mxu0
      %v687 = vadd.f32 0.0, %v686
      %v688 = vpop.f32.mrb[0].mxu0
      %v689 = vadd.f32 0.0, %v688
      %690 = vdwg.mxu0
      %v691 = vld [vmem:[%s4] sm:$0xff]
      %v692 = vld [vmem:[%s4 + $0x8] sm:$0xff]
      %v693 = vld [vmem:[%s239] sm:$0xff]
      %v694 = vld [vmem:[%s239 + $0x8] sm:$0xff]
      %v695 = vsub.f32 %v691, %v693
      %v696 = vsub.f32 %v692, %v694
      %v697 = vld [vmem:[%s3] ss:$8 sm:$0x3]
      %v699 = vlaneseq
      %v700 = vshrl.u32 %v699, 7
      %v701 = vsub.s32 0, %v700
      %v702 = vrot.slane %v697, %v701
      %v703 = vlaneseq
      %v704 = vshrl.u32 %v703, 7
      %v705 = vsub.s32 1, %v704
      %v706 = vrot.slane %v697, %v705
      %v709 = vmul.f32 %v597, %v702
      %v710 = vmul.f32 %v599, %v706
      %v711 = vadd.f32 %v695, %v709
      %v712 = vadd.f32 %v696, %v710
      %s713 = scalar_lea.vmem %s3, 1
      %v714 = vld [vmem:[%s713] ss:$8 sm:$0x3]
      %v716 = vlaneseq
      %v717 = vshrl.u32 %v716, 7
      %v718 = vsub.s32 0, %v717
      %v719 = vrot.slane %v714, %v718
      %v720 = vlaneseq
      %v721 = vshrl.u32 %v720, 7
      %v722 = vsub.s32 1, %v721
      %v723 = vrot.slane %v714, %v722
      %v726 = vmul.f32 %v603, %v719
      %v727 = vmul.f32 %v605, %v723
      %v728 = vadd.f32 %v711, %v726
      %v729 = vadd.f32 %v712, %v727
      %s730 = scalar_lea.vmem %s3, 2
      %v731 = vld [vmem:[%s730] ss:$8 sm:$0x3]
      %v733 = vlaneseq
      %v734 = vshrl.u32 %v733, 7
      %v735 = vsub.s32 0, %v734
      %v736 = vrot.slane %v731, %v735
      %v737 = vlaneseq
      %v738 = vshrl.u32 %v737, 7
      %v739 = vsub.s32 1, %v738
      %v740 = vrot.slane %v731, %v739
      %v743 = vmul.f32 %v609, %v736
      %v744 = vmul.f32 %v611, %v740
      %v745 = vadd.f32 %v728, %v743
      %v746 = vadd.f32 %v729, %v744
      %s747 = scalar_lea.vmem %s3, 3
      %v748 = vld [vmem:[%s747] ss:$8 sm:$0x3]
      %v750 = vlaneseq
      %v751 = vshrl.u32 %v750, 7
      %v752 = vsub.s32 0, %v751
      %v753 = vrot.slane %v748, %v752
      %v754 = vlaneseq
      %v755 = vshrl.u32 %v754, 7
      %v756 = vsub.s32 1, %v755
      %v757 = vrot.slane %v748, %v756
      %v760 = vmul.f32 %v615, %v753
      %v761 = vmul.f32 %v617, %v757
      %v762 = vadd.f32 %v745, %v760
      %v763 = vadd.f32 %v746, %v761
      %s764 = scalar_lea.vmem %s3, 4
      %v765 = vld [vmem:[%s764] ss:$8 sm:$0x3]
      %v767 = vlaneseq
      %v768 = vshrl.u32 %v767, 7
      %v769 = vsub.s32 0, %v768
      %v770 = vrot.slane %v765, %v769
      %v771 = vlaneseq
      %v772 = vshrl.u32 %v771, 7
      %v773 = vsub.s32 1, %v772
      %v774 = vrot.slane %v765, %v773
      %v777 = vmul.f32 %v621, %v770
      %v778 = vmul.f32 %v623, %v774
      %v779 = vadd.f32 %v762, %v777
      %v780 = vadd.f32 %v763, %v778
      %s781 = scalar_lea.vmem %s3, 5
      %v782 = vld [vmem:[%s781] ss:$8 sm:$0x3]
      %v784 = vlaneseq
      %v785 = vshrl.u32 %v784, 7
      %v786 = vsub.s32 0, %v785
      %v787 = vrot.slane %v782, %v786
      %v788 = vlaneseq
      %v789 = vshrl.u32 %v788, 7
      %v790 = vsub.s32 1, %v789
      %v791 = vrot.slane %v782, %v790
      %v794 = vmul.f32 %v627, %v787
      %v795 = vmul.f32 %v629, %v791
      %v796 = vadd.f32 %v779, %v794
      %v797 = vadd.f32 %v780, %v795
      %s798 = scalar_lea.vmem %s3, 6
      %v799 = vld [vmem:[%s798] ss:$8 sm:$0x3]
      %v801 = vlaneseq
      %v802 = vshrl.u32 %v801, 7
      %v803 = vsub.s32 0, %v802
      %v804 = vrot.slane %v799, %v803
      %v805 = vlaneseq
      %v806 = vshrl.u32 %v805, 7
      %v807 = vsub.s32 1, %v806
      %v808 = vrot.slane %v799, %v807
      %v811 = vmul.f32 %v633, %v804
      %v812 = vmul.f32 %v635, %v808
      %v813 = vadd.f32 %v796, %v811
      %v814 = vadd.f32 %v797, %v812
      %s815 = scalar_lea.vmem %s3, 7
      %v816 = vld [vmem:[%s815] ss:$8 sm:$0x3]
      %v818 = vlaneseq
      %v819 = vshrl.u32 %v818, 7
      %v820 = vsub.s32 0, %v819
      %v821 = vrot.slane %v816, %v820
      %v822 = vlaneseq
      %v823 = vshrl.u32 %v822, 7
      %v824 = vsub.s32 1, %v823
      %v825 = vrot.slane %v816, %v824
      %v828 = vmul.f32 %v639, %v821
      %v829 = vmul.f32 %v641, %v825
      %v830 = vadd.f32 %v813, %v828
      %v831 = vadd.f32 %v814, %v829
      %s832 = scalar_lea.vmem %s3, 16
      %v833 = vld [vmem:[%s832] ss:$8 sm:$0x3]
      %v835 = vlaneseq
      %v836 = vshrl.u32 %v835, 7
      %v837 = vsub.s32 0, %v836
      %v838 = vrot.slane %v833, %v837
      %v839 = vlaneseq
      %v840 = vshrl.u32 %v839, 7
      %v841 = vsub.s32 1, %v840
      %v842 = vrot.slane %v833, %v841
      %v845 = vmul.f32 %v645, %v838
      %v846 = vmul.f32 %v647, %v842
      %v847 = vadd.f32 %v830, %v845
      %v848 = vadd.f32 %v831, %v846
      %s849 = scalar_lea.vmem %s3, 17
      %v850 = vld [vmem:[%s849] ss:$8 sm:$0x3]
      %v852 = vlaneseq
      %v853 = vshrl.u32 %v852, 7
      %v854 = vsub.s32 0, %v853
      %v855 = vrot.slane %v850, %v854
      %v856 = vlaneseq
      %v857 = vshrl.u32 %v856, 7
      %v858 = vsub.s32 1, %v857
      %v859 = vrot.slane %v850, %v858
      %v862 = vmul.f32 %v651, %v855
      %v863 = vmul.f32 %v653, %v859
      %v864 = vadd.f32 %v847, %v862
      %v865 = vadd.f32 %v848, %v863
      %s866 = scalar_lea.vmem %s3, 18
      %v867 = vld [vmem:[%s866] ss:$8 sm:$0x3]
      %v869 = vlaneseq
      %v870 = vshrl.u32 %v869, 7
      %v871 = vsub.s32 0, %v870
      %v872 = vrot.slane %v867, %v871
      %v873 = vlaneseq
      %v874 = vshrl.u32 %v873, 7
      %v875 = vsub.s32 1, %v874
      %v876 = vrot.slane %v867, %v875
      %v879 = vmul.f32 %v657, %v872
      %v880 = vmul.f32 %v659, %v876
      %v881 = vadd.f32 %v864, %v879
      %v882 = vadd.f32 %v865, %v880
      %s883 = scalar_lea.vmem %s3, 19
      %v884 = vld [vmem:[%s883] ss:$8 sm:$0x3]
      %v886 = vlaneseq
      %v887 = vshrl.u32 %v886, 7
      %v888 = vsub.s32 0, %v887
      %v889 = vrot.slane %v884, %v888
      %v890 = vlaneseq
      %v891 = vshrl.u32 %v890, 7
      %v892 = vsub.s32 1, %v891
      %v893 = vrot.slane %v884, %v892
      %v896 = vmul.f32 %v663, %v889
      %v897 = vmul.f32 %v665, %v893
      %v898 = vadd.f32 %v881, %v896
      %v899 = vadd.f32 %v882, %v897
      %s900 = scalar_lea.vmem %s3, 20
      %v901 = vld [vmem:[%s900] ss:$8 sm:$0x3]
      %v903 = vlaneseq
      %v904 = vshrl.u32 %v903, 7
      %v905 = vsub.s32 0, %v904
      %v906 = vrot.slane %v901, %v905
      %v907 = vlaneseq
      %v908 = vshrl.u32 %v907, 7
      %v909 = vsub.s32 1, %v908
      %v910 = vrot.slane %v901, %v909
      %v913 = vmul.f32 %v669, %v906
      %v914 = vmul.f32 %v671, %v910
      %v915 = vadd.f32 %v898, %v913
      %v916 = vadd.f32 %v899, %v914
      %s917 = scalar_lea.vmem %s3, 21
      %v918 = vld [vmem:[%s917] ss:$8 sm:$0x3]
      %v920 = vlaneseq
      %v921 = vshrl.u32 %v920, 7
      %v922 = vsub.s32 0, %v921
      %v923 = vrot.slane %v918, %v922
      %v924 = vlaneseq
      %v925 = vshrl.u32 %v924, 7
      %v926 = vsub.s32 1, %v925
      %v927 = vrot.slane %v918, %v926
      %v930 = vmul.f32 %v675, %v923
      %v931 = vmul.f32 %v677, %v927
      %v932 = vadd.f32 %v915, %v930
      %v933 = vadd.f32 %v916, %v931
      %s934 = scalar_lea.vmem %s3, 22
      %v935 = vld [vmem:[%s934] ss:$8 sm:$0x3]
      %v937 = vlaneseq
      %v938 = vshrl.u32 %v937, 7
      %v939 = vsub.s32 0, %v938
      %v940 = vrot.slane %v935, %v939
      %v941 = vlaneseq
      %v942 = vshrl.u32 %v941, 7
      %v943 = vsub.s32 1, %v942
      %v944 = vrot.slane %v935, %v943
      %v947 = vmul.f32 %v681, %v940
      %v948 = vmul.f32 %v683, %v944
      %v949 = vadd.f32 %v932, %v947
      %v950 = vadd.f32 %v933, %v948
      %s951 = scalar_lea.vmem %s3, 23
      %v952 = vld [vmem:[%s951] ss:$8 sm:$0x3]
      %v954 = vlaneseq
      %v955 = vshrl.u32 %v954, 7
      %v956 = vsub.s32 0, %v955
      %v957 = vrot.slane %v952, %v956
      %v958 = vlaneseq
      %v959 = vshrl.u32 %v958, 7
      %v960 = vsub.s32 1, %v959
      %v961 = vrot.slane %v952, %v960
      %v964 = vmul.f32 %v687, %v957
      %v965 = vmul.f32 %v689, %v961
      %v966 = vadd.f32 %v949, %v964
      %v967 = vadd.f32 %v950, %v965
      %v968 = vxor.u32 %v966, 2147483648
      %v969 = vxor.u32 %v967, 2147483648
      %v970 = vmul.f32 %v968, 1.442695
      %v971 = vpow.pop %v970
      %v972 = vmul.f32 %v969, 1.442695
      %v973 = vpow.pop %v972
      %v974 = vadd.f32 %v971, 1.0
      %v975 = vadd.f32 %v973, 1.0
      %v976 = vrcp.pop %v974
      %v977 = vmul.f32 1.0, %v976
      %v978 = vrcp.pop %v975
      %v979 = vmul.f32 1.0, %v978
      %980 = vst [vmem:[%s244] sm:$0xff] %v977
      %981 = vst [vmem:[%s244 + $0x8] sm:$0xff] %v979
      %p982 = scmp.lt.s32.totalorder %s16, 1
      %s983 = scalar_select %p982, %s16, 1
      %s984 = smul.addr %s983, 2
      %s985 = smul.addr %s984, 8
      %s986 = scalar_lea.vmem %s5, %s985
      // Predicated region
      $region41: #{model_forward.1} parent=39 // pred_check
        %p987 = pneg %p149
      $region42: #{model_forward.1} parent=39 // pred_check_branch
        %989 = sbr.rel (%p987) target = $region44
      $region43: #{model_forward.1} parent=39 // pred_region
        _
      $region44: #{model_forward.1} parent=39 // pred_fallthru
        _
    $region40: #{model_forward.1} parent=5 // pred_fallthru
      _
    %p990 = scmp.le.s32.totalorder 2, %s11
    // Predicated region
    $region45: #{model_forward.1} parent=5 // pred_check
      %p991 = pneg %p990
    $region46: #{model_forward.1} parent=5 // pred_check_branch
      %993 = sbr.rel (%p991) target = $region48
    $region47: #{model_forward.1} parent=5 // pred_region
      %s994 = ssub.s32 %s11, 2
      // Predicated region
      $region49: #{model_forward.1} parent=47 // pred_check
        %p995 = pneg %p155
      $region50: #{model_forward.1} parent=47 // pred_check_branch
        %997 = sbr.rel (%p995) target = $region52
      $region51: #{model_forward.1} parent=47 // pred_region
        %p998 = scmp.lt.s32.totalorder %s17, 1
        %s999 = scalar_select %p998, %s17, 1
        %s1000 = smul.addr %s999, 2
        %s1001 = smul.addr %s1000, 8
        %s1002 = scalar_lea.vmem %s5, %s1001
      $region52: #{model_forward.1} parent=47 // pred_fallthru
        _
    $region48: #{model_forward.1} parent=5 // pred_fallthru
      _
  $region6: #{model_forward.1} parent=0 // loop_footer
    %s15 = sadd.s32 1, %s11
  $region7: #{model_forward.1} parent=0 // loop_footer_branch
    %10 = sbr.rel target = $region3
  $region8: #{model_forward.1} parent=0 // loop_exit
    _

</llo_original>
